<compile_context>
chip_gen: v7x
topology: tpu7x:2x2x1
jax: 0.10.0
libtpu: 0.0.40
codegen_flags: <defaults>
</compile_context>

<pallas_src>
import functools

import jax
import jax.numpy as jnp
from jax.experimental import pallas as pl
from jax.experimental.pallas import tpu as pltpu

LANE = 128
MAX_TB = 1024  # rows per batch block (bf16 x tile: 1024*128*2 B = 256 KiB)


def _round_up(x, m):
    return ((x + m - 1) // m) * m


def mlp_kernel(x_ref,
               w1_ref, b1_ref,
               w2_ref, b2_ref,
               w3_ref, b3_ref,
               w4_ref, b4_ref,
               o_ref):
    # hidden1 + ReLU  (bf16 operands, f32 accumulate, f32 bias/ReLU)
    h = jnp.dot(x_ref[...], w1_ref[...], preferred_element_type=jnp.float32)
    h = jnp.maximum(h + b1_ref[...], 0.0)
    # hidden2 + ReLU
    h = jnp.dot(h.astype(jnp.bfloat16), w2_ref[...],
                preferred_element_type=jnp.float32)
    h = jnp.maximum(h + b2_ref[...], 0.0)
    # hidden3 + ReLU
    h = jnp.dot(h.astype(jnp.bfloat16), w3_ref[...],
                preferred_element_type=jnp.float32)
    h = jnp.maximum(h + b3_ref[...], 0.0)
    # hidden4 (no activation)
    h = jnp.dot(h.astype(jnp.bfloat16), w4_ref[...],
                preferred_element_type=jnp.float32)
    o_ref[...] = (h + b4_ref[...]).astype(o_ref.dtype)


def _pad2d(a, rows, cols):
    r, c = a.shape
    return jnp.pad(a, ((0, rows - r), (0, cols - c)))


def prepare_params(params):
    """One-time preparation (hoisted out of the forward path).

    params: list of (W_t, b) with W_t (in, out) f32, b (1, out) f32.
    Returns a flat tuple (w1, b1, w2, b2, w3, b3, w4, b4) with weights padded
    to 128-multiples and cast to bf16, biases padded and kept in f32.
    """
    flat = []
    prev_p = _round_up(params[0][0].shape[0], LANE)
    for w_t, b in params:
        _, fout = w_t.shape
        fout_p = _round_up(fout, LANE)
        flat.append(_pad2d(w_t, prev_p, fout_p).astype(jnp.bfloat16))
        flat.append(_pad2d(b, 1, fout_p).astype(jnp.float32))
        prev_p = fout_p
    return tuple(flat)


@functools.partial(jax.jit, static_argnames=("out_features",))
def mlp_forward(x, flat_params, *, out_features):
    """x: (B, inputs) f32. flat_params: output of prepare_params().
    Returns (B, out_features) f32."""
    B, in_features = x.shape
    in_p = flat_params[0].shape[0]
    out_p = flat_params[-1].shape[1]

    # Adaptive batch tiling: pad only to a multiple of 8 sublanes, use >= 2
    # blocks when B > 8 (megacore on v7x), cap the block at MAX_TB rows.
    B8 = _round_up(B, 8)
    nb = pl.cdiv(B8, MAX_TB)
    if B8 > 8:
        nb = max(nb, 2)
    TB = _round_up(pl.cdiv(B8, nb), 8)
    B_pad = nb * TB

    x_p = jnp.pad(x, ((0, B_pad - B), (0, in_p - in_features)))
    x_p = x_p.astype(jnp.bfloat16)

    x_spec = pl.BlockSpec((TB, in_p), lambda i: (i, 0))
    out_spec = pl.BlockSpec((TB, out_p), lambda i: (i, 0))
    # Constant block index -> weights/biases DMA'd once, VMEM-resident.
    param_specs = [pl.BlockSpec(p.shape, lambda i: (0, 0)) for p in flat_params]

    # Cost estimate on the padded work the MXU actually executes.
    w_pads = flat_params[0::2]
    flops = 2 * B_pad * sum(int(w.shape[0]) * int(w.shape[1]) for w in w_pads)
    bytes_accessed = (2 * B_pad * in_p                      # bf16 x in
                      + 4 * B_pad * out_p                   # f32 out
                      + sum(int(p.size) * p.dtype.itemsize for p in flat_params))

    out = pl.pallas_call(
        mlp_kernel,
        out_shape=jax.ShapeDtypeStruct((B_pad, out_p), jnp.float32),
        grid=(nb,),
        in_specs=[x_spec] + param_specs,
        out_specs=out_spec,
        compiler_params=pltpu.CompilerParams(
            dimension_semantics=("parallel",)),
        cost_estimate=pl.CostEstimate(
            flops=flops, transcendentals=0, bytes_accessed=bytes_accessed),
    )(x_p, *flat_params)
    return out[:B, :out_features]


def xavier_uniform(key, out_features, in_features):
    # torch.nn.init.xavier_uniform_ with gain=1
    bound = (6.0 / (in_features + out_features)) ** 0.5
    return jax.random.uniform(key, (out_features, in_features),
                              minval=-bound, maxval=bound, dtype=jnp.float32)


def linear_bias(key, in_features, out_features):
    # torch Linear default bias init: U(-1/sqrt(fan_in), 1/sqrt(fan_in))
    bound = 1.0 / (in_features ** 0.5)
    return jax.random.uniform(key, (1, out_features),
                              minval=-bound, maxval=bound, dtype=jnp.float32)


def init_mlp_params(key, inputs, outputs):
    dims = [(inputs, 50), (50, 100), (100, 50), (50, outputs)]
    params = []
    for (fan_in, fan_out) in dims:
        key, kw, kb = jax.random.split(key, 3)
        w = xavier_uniform(kw, fan_out, fan_in)          # (out, in) like torch
        b = linear_bias(kb, fan_in, fan_out)             # (1, out)
        params.append((w.T, b))                          # store transposed
    return params


def mlp_reference(x, params):
    h = x
    for i, (w_t, b) in enumerate(params):
        h = h @ w_t + b
        if i < len(params) - 1:
            h = jnp.maximum(h, 0.0)
    return h


if __name__ == "__main__":
    key = jax.random.PRNGKey(0)
    kp, kx = jax.random.split(key)

    batch, inputs, outputs = 8, 1, 1   # regression setup implied by the script
    params = init_mlp_params(kp, inputs, outputs)
    flat_params = prepare_params(params)   # one-time pad + bf16 cast
    # inputs in [0, 1] like the linspace dataset
    x = jax.random.uniform(kx, (batch, inputs), dtype=jnp.float32)

    out = mlp_forward(x, flat_params, out_features=outputs)
    out = jax.block_until_ready(out)

    ref = mlp_reference(x, params)
    assert out.shape == (batch, outputs)
    # bf16 matmul operands with f32 accumulation -> relaxed tolerance vs f32 ref
    assert jnp.allclose(out, ref, atol=5e-2, rtol=5e-2)

    print("KERNEL_OK")
</pallas_src>

<mosaic_0001>
module attributes {stable_mosaic.version = 11 : i64} {
  func.func @mlp_kernel(%arg0: i32, %arg1: memref<8x128xbf16, #tpu.memory_space<vmem>>, %arg2: memref<128x128xbf16, #tpu.memory_space<vmem>>, %arg3: memref<1x128xf32, #tpu.memory_space<vmem>>, %arg4: memref<128x128xbf16, #tpu.memory_space<vmem>>, %arg5: memref<1x128xf32, #tpu.memory_space<vmem>>, %arg6: memref<128x128xbf16, #tpu.memory_space<vmem>>, %arg7: memref<1x128xf32, #tpu.memory_space<vmem>>, %arg8: memref<128x128xbf16, #tpu.memory_space<vmem>>, %arg9: memref<1x128xf32, #tpu.memory_space<vmem>>, %arg10: memref<8x128xf32, #tpu.memory_space<vmem>>) attributes {dimension_semantics = [#tpu.dimension_semantics<parallel>], iteration_bounds = array<i64: 1>, scalar_prefetch = 0 : i64, scratch_operands = 0 : i64, tpu.core_type = #tpu.core_type<tc>, window_params = [{transform_indices = @transform_0, window_bounds = array<i64: 8, 128>}, {pipeline_mode = #tpu.pipeline_mode<synchronous>, transform_indices = @transform_1, window_bounds = array<i64: 128, 128>}, {pipeline_mode = #tpu.pipeline_mode<synchronous>, transform_indices = @transform_2, window_bounds = array<i64: 1, 128>}, {pipeline_mode = #tpu.pipeline_mode<synchronous>, transform_indices = @transform_3, window_bounds = array<i64: 128, 128>}, {pipeline_mode = #tpu.pipeline_mode<synchronous>, transform_indices = @transform_4, window_bounds = array<i64: 1, 128>}, {pipeline_mode = #tpu.pipeline_mode<synchronous>, transform_indices = @transform_5, window_bounds = array<i64: 128, 128>}, {pipeline_mode = #tpu.pipeline_mode<synchronous>, transform_indices = @transform_6, window_bounds = array<i64: 1, 128>}, {pipeline_mode = #tpu.pipeline_mode<synchronous>, transform_indices = @transform_7, window_bounds = array<i64: 128, 128>}, {pipeline_mode = #tpu.pipeline_mode<synchronous>, transform_indices = @transform_8, window_bounds = array<i64: 1, 128>}, {transform_indices = @transform_9, window_bounds = array<i64: 8, 128>}]} {
    %c0 = arith.constant 0 : index
    %c0_0 = arith.constant 0 : index
    %0 = vector.load %arg1[%c0, %c0_0] : memref<8x128xbf16, #tpu.memory_space<vmem>>, vector<8x128xbf16>
    %c0_1 = arith.constant 0 : index
    %c0_2 = arith.constant 0 : index
    %1 = vector.load %arg2[%c0_1, %c0_2] : memref<128x128xbf16, #tpu.memory_space<vmem>>, vector<128x128xbf16>
    %cst = arith.constant dense<0.000000e+00> : vector<8x128xf32>
    %2 = tpu.matmul %0, %1, %cst {dimension_numbers = #tpu.dot_dimension_numbers<[1], [0], [0], [1], [0, 0, 1, 1], [], []>} : vector<8x128xbf16>, vector<128x128xbf16>, vector<8x128xf32> -> vector<8x128xf32>
    %c0_3 = arith.constant 0 : index
    %c0_4 = arith.constant 0 : index
    %3 = vector.load %arg3[%c0_3, %c0_4] : memref<1x128xf32, #tpu.memory_space<vmem>>, vector<1x128xf32>
    %4 = vector.broadcast %3 : vector<1x128xf32> to vector<8x128xf32>
    %5 = arith.addf %2, %4 : vector<8x128xf32>
    %cst_5 = arith.constant 0.000000e+00 : f32
    %6 = vector.broadcast %cst_5 : f32 to vector<8x128xf32>
    %7 = arith.maximumf %5, %6 : vector<8x128xf32>
    %8 = arith.truncf %7 : vector<8x128xf32> to vector<8x128xbf16>
    %c0_6 = arith.constant 0 : index
    %c0_7 = arith.constant 0 : index
    %9 = vector.load %arg4[%c0_6, %c0_7] : memref<128x128xbf16, #tpu.memory_space<vmem>>, vector<128x128xbf16>
    %cst_8 = arith.constant dense<0.000000e+00> : vector<8x128xf32>
    %10 = tpu.matmul %8, %9, %cst_8 {dimension_numbers = #tpu.dot_dimension_numbers<[1], [0], [0], [1], [0, 0, 1, 1], [], []>} : vector<8x128xbf16>, vector<128x128xbf16>, vector<8x128xf32> -> vector<8x128xf32>
    %c0_9 = arith.constant 0 : index
    %c0_10 = arith.constant 0 : index
    %11 = vector.load %arg5[%c0_9, %c0_10] : memref<1x128xf32, #tpu.memory_space<vmem>>, vector<1x128xf32>
    %12 = vector.broadcast %11 : vector<1x128xf32> to vector<8x128xf32>
    %13 = arith.addf %10, %12 : vector<8x128xf32>
    %cst_11 = arith.constant 0.000000e+00 : f32
    %14 = vector.broadcast %cst_11 : f32 to vector<8x128xf32>
    %15 = arith.maximumf %13, %14 : vector<8x128xf32>
    %16 = arith.truncf %15 : vector<8x128xf32> to vector<8x128xbf16>
    %c0_12 = arith.constant 0 : index
    %c0_13 = arith.constant 0 : index
    %17 = vector.load %arg6[%c0_12, %c0_13] : memref<128x128xbf16, #tpu.memory_space<vmem>>, vector<128x128xbf16>
    %cst_14 = arith.constant dense<0.000000e+00> : vector<8x128xf32>
    %18 = tpu.matmul %16, %17, %cst_14 {dimension_numbers = #tpu.dot_dimension_numbers<[1], [0], [0], [1], [0, 0, 1, 1], [], []>} : vector<8x128xbf16>, vector<128x128xbf16>, vector<8x128xf32> -> vector<8x128xf32>
    %c0_15 = arith.constant 0 : index
    %c0_16 = arith.constant 0 : index
    %19 = vector.load %arg7[%c0_15, %c0_16] : memref<1x128xf32, #tpu.memory_space<vmem>>, vector<1x128xf32>
    %20 = vector.broadcast %19 : vector<1x128xf32> to vector<8x128xf32>
    %21 = arith.addf %18, %20 : vector<8x128xf32>
    %cst_17 = arith.constant 0.000000e+00 : f32
    %22 = vector.broadcast %cst_17 : f32 to vector<8x128xf32>
    %23 = arith.maximumf %21, %22 : vector<8x128xf32>
    %24 = arith.truncf %23 : vector<8x128xf32> to vector<8x128xbf16>
    %c0_18 = arith.constant 0 : index
    %c0_19 = arith.constant 0 : index
    %25 = vector.load %arg8[%c0_18, %c0_19] : memref<128x128xbf16, #tpu.memory_space<vmem>>, vector<128x128xbf16>
    %cst_20 = arith.constant dense<0.000000e+00> : vector<8x128xf32>
    %26 = tpu.matmul %24, %25, %cst_20 {dimension_numbers = #tpu.dot_dimension_numbers<[1], [0], [0], [1], [0, 0, 1, 1], [], []>} : vector<8x128xbf16>, vector<128x128xbf16>, vector<8x128xf32> -> vector<8x128xf32>
    %c0_21 = arith.constant 0 : index
    %c0_22 = arith.constant 0 : index
    %27 = vector.load %arg9[%c0_21, %c0_22] : memref<1x128xf32, #tpu.memory_space<vmem>>, vector<1x128xf32>
    %28 = vector.broadcast %27 : vector<1x128xf32> to vector<8x128xf32>
    %29 = arith.addf %26, %28 : vector<8x128xf32>
    %c0_23 = arith.constant 0 : index
    %c0_24 = arith.constant 0 : index
    %30 = vector.load %arg10[%c0_23, %c0_24] : memref<8x128xf32, #tpu.memory_space<vmem>>, vector<8x128xf32>
    tpu.vector_store %arg10[%c0_23, %c0_24], %29 {strides = array<i32>} : memref<8x128xf32, #tpu.memory_space<vmem>>, vector<8x128xf32>,
    return
  }
  func.func @transform_0(%arg0: i32) -> (i32, i32) {
    %c0_i32 = arith.constant 0 : i32
    %c0_i32_0 = arith.constant 0 : i32
    return %arg0, %c0_i32 : i32, i32
  }
  func.func @transform_1(%arg0: i32) -> (i32, i32) {
    %c0_i32 = arith.constant 0 : i32
    %c0_i32_0 = arith.constant 0 : i32
    %c0_i32_1 = arith.constant 0 : i32
    return %c0_i32, %c0_i32_0 : i32, i32
  }
  func.func @transform_2(%arg0: i32) -> (i32, i32) {
    %c0_i32 = arith.constant 0 : i32
    %c0_i32_0 = arith.constant 0 : i32
    %c0_i32_1 = arith.constant 0 : i32
    return %c0_i32, %c0_i32_0 : i32, i32
  }
  func.func @transform_3(%arg0: i32) -> (i32, i32) {
    %c0_i32 = arith.constant 0 : i32
    %c0_i32_0 = arith.constant 0 : i32
    %c0_i32_1 = arith.constant 0 : i32
    return %c0_i32, %c0_i32_0 : i32, i32
  }
  func.func @transform_4(%arg0: i32) -> (i32, i32) {
    %c0_i32 = arith.constant 0 : i32
    %c0_i32_0 = arith.constant 0 : i32
    %c0_i32_1 = arith.constant 0 : i32
    return %c0_i32, %c0_i32_0 : i32, i32
  }
  func.func @transform_5(%arg0: i32) -> (i32, i32) {
    %c0_i32 = arith.constant 0 : i32
    %c0_i32_0 = arith.constant 0 : i32
    %c0_i32_1 = arith.constant 0 : i32
    return %c0_i32, %c0_i32_0 : i32, i32
  }
  func.func @transform_6(%arg0: i32) -> (i32, i32) {
    %c0_i32 = arith.constant 0 : i32
    %c0_i32_0 = arith.constant 0 : i32
    %c0_i32_1 = arith.constant 0 : i32
    return %c0_i32, %c0_i32_0 : i32, i32
  }
  func.func @transform_7(%arg0: i32) -> (i32, i32) {
    %c0_i32 = arith.constant 0 : i32
    %c0_i32_0 = arith.constant 0 : i32
    %c0_i32_1 = arith.constant 0 : i32
    return %c0_i32, %c0_i32_0 : i32, i32
  }
  func.func @transform_8(%arg0: i32) -> (i32, i32) {
    %c0_i32 = arith.constant 0 : i32
    %c0_i32_0 = arith.constant 0 : i32
    %c0_i32_1 = arith.constant 0 : i32
    return %c0_i32, %c0_i32_0 : i32, i32
  }
  func.func @transform_9(%arg0: i32) -> (i32, i32) {
    %c0_i32 = arith.constant 0 : i32
    %c0_i32_0 = arith.constant 0 : i32
    return %arg0, %c0_i32 : i32, i32
  }
}

</mosaic_0001>

<llo_original>
// kernel: mlp_forward.1
$region0: #{mlp_forward.1}
  #allocation0 [shape = 'u32[]', space=smem, size = 0x4, offset = 0x4, fixed_abs, tag = 'smem constant byte address 0x4 - core index']
  #allocation1 [shape = 'u32[144,128]{1,0:T(1,128)}', space=vmem, size = 0x12000, scoped, tag = 'internal scratch']
  %s0 = inlined_call_operand.vmem [shape: bf16[8,128], index: 0, kind: input, shape index: {}]
  %s1 = inlined_call_operand.hbm [shape: bf16[128,128], index: 1, kind: input, shape index: {}]
  %s2 = inlined_call_operand.vmem [shape: f32[1,128], index: 2, kind: input, shape index: {}]
  %s3 = inlined_call_operand.hbm [shape: bf16[128,128], index: 3, kind: input, shape index: {}]
  %s4 = inlined_call_operand.vmem [shape: f32[1,128], index: 4, kind: input, shape index: {}]
  %s5 = inlined_call_operand.hbm [shape: bf16[128,128], index: 5, kind: input, shape index: {}]
  %s6 = inlined_call_operand.vmem [shape: f32[1,128], index: 6, kind: input, shape index: {}]
  %s7 = inlined_call_operand.hbm [shape: bf16[128,128], index: 7, kind: input, shape index: {}]
  %s8 = inlined_call_operand.vmem [shape: f32[1,128], index: 8, kind: input, shape index: {}]
  %s9 = inlined_call_operand.vmem [shape: f32[8,128], index: 9, kind: output, shape index: {}]
  %s10 = sld [smem:[#allocation0]]
  $region62: #{mlp_forward.1} parent=0
    _
  %s12 = ssub.s32 1, %s10
  %s13 = scalar_select 0, %s12, %s10
  $region1: #{mlp_forward.1} parent=0
    #allocation2 [shape = 'u8[32768]{0}', space=vmem, size = 0x8000, scoped, tag = 'input window, operand 1, single buffered']
    #allocation3 [shape = 's32[1]{0}', space=sflag, size = 0x4, scoped, tag = 'scoped memory for mlp_forward.1']
    #allocation4 [shape = 'u8[32768]{0}', space=vmem, size = 0x8000, scoped, tag = 'input window, operand 3, single buffered']
    #allocation5 [shape = 's32[1]{0}', space=sflag, size = 0x4, scoped, tag = 'scoped memory for mlp_forward.1']
    #allocation6 [shape = 'u8[32768]{0}', space=vmem, size = 0x8000, scoped, tag = 'input window, operand 5, single buffered']
    #allocation7 [shape = 'u8[32768]{0}', space=vmem, size = 0x8000, scoped, tag = 'input window, operand 7, single buffered']
    #allocation8 [shape = 's32[1]{0}', space=sflag, size = 0x4, scoped, tag = 'scoped memory for mlp_forward.1']
    %14 = vsyncpa [#allocation3], 0
    %15 = vsyncpa [#allocation5], 0
    %16 = vsyncpa [#allocation8], 0
    // Predicated region
    $region2: #{mlp_forward.1} parent=1 // pred_check
      _
    $region3: #{mlp_forward.1} parent=1 // pred_check_branch
      %18 = sbr.rel (0) target = $region5
    $region4: #{mlp_forward.1} parent=1 // pred_region
      _
    $region5: #{mlp_forward.1} parent=1 // pred_fallthru
      _
    // Predicated region
    $region6: #{mlp_forward.1} parent=1 // pred_check
      _
    $region7: #{mlp_forward.1} parent=1 // pred_check_branch
      %20 = sbr.rel (0) target = $region9
    $region8: #{mlp_forward.1} parent=1 // pred_region
      %s22 = ssub.s32 1024, 1024
      %23 = vsyncadd [#allocation3], %s22
      %s24 = sshll.u32 [#allocation2], 4
      %s25 = int_to_ptr.vmem [resolvable:$true] %s24
      %30 = dma.hbm_to_vmem [thread:$0]  %s1, 1024, %s25, [#allocation3], 64, 64, 4
    $region9: #{mlp_forward.1} parent=1 // pred_fallthru
      _
    // Predicated region
    $region10: #{mlp_forward.1} parent=1 // pred_check
      _
    $region11: #{mlp_forward.1} parent=1 // pred_check_branch
      %32 = sbr.rel (0) target = $region13
    $region12: #{mlp_forward.1} parent=1 // pred_region
      _
    $region13: #{mlp_forward.1} parent=1 // pred_fallthru
      _
    // Predicated region
    $region14: #{mlp_forward.1} parent=1 // pred_check
      _
    $region15: #{mlp_forward.1} parent=1 // pred_check_branch
      %34 = sbr.rel (0) target = $region17
    $region16: #{mlp_forward.1} parent=1 // pred_region
      %s36 = ssub.s32 1024, 1024
      %37 = vsyncadd [#allocation5], %s36
      %s38 = sshll.u32 [#allocation4], 4
      %s39 = int_to_ptr.vmem [resolvable:$true] %s38
      %44 = dma.hbm_to_vmem [thread:$0]  %s3, 1024, %s39, [#allocation5], 64, 64, 4
    $region17: #{mlp_forward.1} parent=1 // pred_fallthru
      _
    // Predicated region
    $region18: #{mlp_forward.1} parent=1 // pred_check
      _
    $region19: #{mlp_forward.1} parent=1 // pred_check_branch
      %46 = sbr.rel (0) target = $region21
    $region20: #{mlp_forward.1} parent=1 // pred_region
      _
    $region21: #{mlp_forward.1} parent=1 // pred_fallthru
      _
    // Predicated region
    $region22: #{mlp_forward.1} parent=1 // pred_check
      _
    $region23: #{mlp_forward.1} parent=1 // pred_check_branch
      %48 = sbr.rel (0) target = $region25
    $region24: #{mlp_forward.1} parent=1 // pred_region
      %s50 = ssub.s32 1024, 1024
      %51 = vsyncadd [#allocation5], %s50
      %s52 = sshll.u32 [#allocation6], 4
      %s53 = int_to_ptr.vmem [resolvable:$true] %s52
      %58 = dma.hbm_to_vmem [thread:$0]  %s5, 1024, %s53, [#allocation5], 64, 64, 4
    $region25: #{mlp_forward.1} parent=1 // pred_fallthru
      _
    // Predicated region
    $region26: #{mlp_forward.1} parent=1 // pred_check
      _
    $region27: #{mlp_forward.1} parent=1 // pred_check_branch
      %60 = sbr.rel (0) target = $region29
    $region28: #{mlp_forward.1} parent=1 // pred_region
      _
    $region29: #{mlp_forward.1} parent=1 // pred_fallthru
      _
    // Predicated region
    $region30: #{mlp_forward.1} parent=1 // pred_check
      _
    $region31: #{mlp_forward.1} parent=1 // pred_check_branch
      %62 = sbr.rel (0) target = $region33
    $region32: #{mlp_forward.1} parent=1 // pred_region
      %s64 = ssub.s32 1024, 1024
      %65 = vsyncadd [#allocation8], %s64
      %s66 = sshll.u32 [#allocation7], 4
      %s67 = int_to_ptr.vmem [resolvable:$true] %s66
      %72 = dma.hbm_to_vmem [thread:$0]  %s7, 1024, %s67, [#allocation8], 64, 64, 4
    $region33: #{mlp_forward.1} parent=1 // pred_fallthru
      _
    // Predicated region
    $region34: #{mlp_forward.1} parent=1 // pred_check
      _
    $region35: #{mlp_forward.1} parent=1 // pred_check_branch
      %74 = sbr.rel (0) target = $region37
    $region36: #{mlp_forward.1} parent=1 // pred_region
      _
    $region37: #{mlp_forward.1} parent=1 // pred_fallthru
      _
    // Predicated region
    $region38: #{mlp_forward.1} parent=1 // pred_check
      _
    $region39: #{mlp_forward.1} parent=1 // pred_check_branch
      %76 = sbr.rel (0) target = $region41
    $region40: #{mlp_forward.1} parent=1 // pred_region
      %77 = dma.done [#allocation3], 1024
    $region41: #{mlp_forward.1} parent=1 // pred_fallthru
      _
    // Predicated region
    $region42: #{mlp_forward.1} parent=1 // pred_check
      _
    $region43: #{mlp_forward.1} parent=1 // pred_check_branch
      %79 = sbr.rel (0) target = $region45
    $region44: #{mlp_forward.1} parent=1 // pred_region
      %80 = dma.done [#allocation5], 1024
    $region45: #{mlp_forward.1} parent=1 // pred_fallthru
      _
    // Predicated region
    $region46: #{mlp_forward.1} parent=1 // pred_check
      _
    $region47: #{mlp_forward.1} parent=1 // pred_check_branch
      %82 = sbr.rel (0) target = $region49
    $region48: #{mlp_forward.1} parent=1 // pred_region
      %83 = dma.done [#allocation5], 1024
    $region49: #{mlp_forward.1} parent=1 // pred_fallthru
      _
    // Predicated region
    $region50: #{mlp_forward.1} parent=1 // pred_check
      _
    $region51: #{mlp_forward.1} parent=1 // pred_check_branch
      %85 = sbr.rel (0) target = $region53
    $region52: #{mlp_forward.1} parent=1 // pred_region
      %86 = dma.done [#allocation8], 1024
    $region53: #{mlp_forward.1} parent=1 // pred_fallthru
      _
    %v88 = vld [vmem:[%s0] sm:$0xf]
    %v89 = vld [vmem:[#allocation2] sm:$0xf]
    %v90 = vld [vmem:[#allocation2 + $0x4] sm:$0xf]
    %v91 = vld [vmem:[#allocation2 + $0x8] sm:$0xf]
    %v92 = vld [vmem:[#allocation2 + $0xc] sm:$0xf]
    %v93 = vld [vmem:[#allocation2 + $0x10] sm:$0xf]
    %v94 = vld [vmem:[#allocation2 + $0x14] sm:$0xf]
    %v95 = vld [vmem:[#allocation2 + $0x18] sm:$0xf]
    %v96 = vld [vmem:[#allocation2 + $0x1c] sm:$0xf]
    %v97 = vld [vmem:[#allocation2 + $0x20] sm:$0xf]
    %v98 = vld [vmem:[#allocation2 + $0x24] sm:$0xf]
    %v99 = vld [vmem:[#allocation2 + $0x28] sm:$0xf]
    %v100 = vld [vmem:[#allocation2 + $0x2c] sm:$0xf]
    %v101 = vld [vmem:[#allocation2 + $0x30] sm:$0xf]
    %v102 = vld [vmem:[#allocation2 + $0x34] sm:$0xf]
    %v103 = vld [vmem:[#allocation2 + $0x38] sm:$0xf]
    %v104 = vld [vmem:[#allocation2 + $0x3c] sm:$0xf]
    %v105 = vld [vmem:[%s2] sm:$0x1]
    %v107 = vlaneseq
    %v108 = vshrl.u32 %v107, 7
    %v109 = vsub.s32 0, %v108
    %v110 = vrot.slane %v105, %v109
    %v128 = vunpack.c.l.b16 %v89
    %v129 = vunpack.c.l.b16 %v90
    %v130 = vunpack.c.l.b16 %v91
    %v131 = vunpack.c.l.b16 %v92
    %v132 = vunpack.c.l.b16 %v93
    %v133 = vunpack.c.l.b16 %v94
    %v134 = vunpack.c.l.b16 %v95
    %v135 = vunpack.c.l.b16 %v96
    %v136 = vunpack.c.l.b16 %v97
    %v137 = vunpack.c.l.b16 %v98
    %v138 = vunpack.c.l.b16 %v99
    %v139 = vunpack.c.l.b16 %v100
    %v140 = vunpack.c.l.b16 %v101
    %v141 = vunpack.c.l.b16 %v102
    %v142 = vunpack.c.l.b16 %v103
    %v143 = vunpack.c.l.b16 %v104
    %v144 = vpack.c.b16 %v129, %v128
    %v145 = vpack.c.b16 %v131, %v130
    %v146 = vpack.c.b16 %v133, %v132
    %v147 = vpack.c.b16 %v135, %v134
    %v148 = vpack.c.b16 %v137, %v136
    %v149 = vpack.c.b16 %v139, %v138
    %v150 = vpack.c.b16 %v141, %v140
    %v151 = vpack.c.b16 %v143, %v142
    %160 = vmatprep.subr.bf16.mxu0 0
    %161 = vmatpush1.bf16.msra.mxu0 %v144
    %162 = vmatprep.subr.bf16.mxu0 0
    %163 = vmatpush1.bf16.msra.mxu0 %v145
    %164 = vmatprep.subr.bf16.mxu0 0
    %165 = vmatpush1.bf16.msra.mxu0 %v146
    %166 = vmatprep.subr.bf16.mxu0 0
    %167 = vmatpush1.bf16.msra.mxu0 %v147
    %168 = vmatprep.subr.bf16.mxu0 0
    %169 = vmatpush1.bf16.msra.mxu0 %v148
    %170 = vmatprep.subr.bf16.mxu0 0
    %171 = vmatpush1.bf16.msra.mxu0 %v149
    %172 = vmatprep.subr.bf16.mxu0 0
    %173 = vmatpush1.bf16.msra.mxu0 %v150
    %174 = vmatprep.subr.bf16.mxu0 0
    %175 = vmatpush1.bf16.msra.mxu0 %v151
    %176 = vmatprep.subr.bf16.mxu0 0
    %177 = vmatpush1.bf16.msra.mxu0 0
    %178 = vmatprep.subr.bf16.mxu0 0
    %179 = vmatpush1.bf16.msra.mxu0 0
    %180 = vmatprep.subr.bf16.mxu0 0
    %181 = vmatpush1.bf16.msra.mxu0 0
    %182 = vmatprep.subr.bf16.mxu0 0
    %183 = vmatpush1.bf16.msra.mxu0 0
    %184 = vmatprep.subr.bf16.mxu0 0
    %185 = vmatpush1.bf16.msra.mxu0 0
    %186 = vmatprep.subr.bf16.mxu0 0
    %187 = vmatpush1.bf16.msra.mxu0 0
    %188 = vmatprep.subr.bf16.mxu0 0
    %189 = vmatpush1.bf16.msra.mxu0 0
    %190 = vmatprep.subr.bf16.mxu0 0
    %191 = vmatpush1.bf16.msra.mxu0 0
    %192 = vmatprep.mubr.bf16.mxu0 0
    %193 = vmatmul.mubr.bf16.gmra.mrb[0].mxu0 %v88
    %v194 = vpop.f32.mrb[0].mxu0
    %v195 = vadd.f32 %v110, %v194
    %v196 = vpop.f32.mrb[0].mxu0
    %v197 = vpop.f32.mrb[0].mxu0
    %v198 = vpop.f32.mrb[0].mxu0
    %199 = vdwg.mxu0
    %v200 = vmax.f32 %v195, 0.0
    %v201 = vpack.c.bf16 %v200, %v200
    %v202 = vld [vmem:[#allocation4] sm:$0xf]
    %v203 = vld [vmem:[#allocation4 + $0x4] sm:$0xf]
    %v204 = vld [vmem:[#allocation4 + $0x8] sm:$0xf]
    %v205 = vld [vmem:[#allocation4 + $0xc] sm:$0xf]
    %v206 = vld [vmem:[#allocation4 + $0x10] sm:$0xf]
    %v207 = vld [vmem:[#allocation4 + $0x14] sm:$0xf]
    %v208 = vld [vmem:[#allocation4 + $0x18] sm:$0xf]
    %v209 = vld [vmem:[#allocation4 + $0x1c] sm:$0xf]
    %v210 = vld [vmem:[#allocation4 + $0x20] sm:$0xf]
    %v211 = vld [vmem:[#allocation4 + $0x24] sm:$0xf]
    %v212 = vld [vmem:[#allocation4 + $0x28] sm:$0xf]
    %v213 = vld [vmem:[#allocation4 + $0x2c] sm:$0xf]
    %v214 = vld [vmem:[#allocation4 + $0x30] sm:$0xf]
    %v215 = vld [vmem:[#allocation4 + $0x34] sm:$0xf]
    %v216 = vld [vmem:[#allocation4 + $0x38] sm:$0xf]
    %v217 = vld [vmem:[#allocation4 + $0x3c] sm:$0xf]
    %v218 = vld [vmem:[%s4] sm:$0x1]
    %v220 = vlaneseq
    %v221 = vshrl.u32 %v220, 7
    %v222 = vsub.s32 0, %v221
    %v223 = vrot.slane %v218, %v222
    %v241 = vunpack.c.l.b16 %v202
    %v242 = vunpack.c.l.b16 %v203
    %v243 = vunpack.c.l.b16 %v204
    %v244 = vunpack.c.l.b16 %v205
    %v245 = vunpack.c.l.b16 %v206
    %v246 = vunpack.c.l.b16 %v207
    %v247 = vunpack.c.l.b16 %v208
    %v248 = vunpack.c.l.b16 %v209
    %v249 = vunpack.c.l.b16 %v210
    %v250 = vunpack.c.l.b16 %v211
    %v251 = vunpack.c.l.b16 %v212
    %v252 = vunpack.c.l.b16 %v213
    %v253 = vunpack.c.l.b16 %v214
    %v254 = vunpack.c.l.b16 %v215
    %v255 = vunpack.c.l.b16 %v216
    %v256 = vunpack.c.l.b16 %v217
    %v257 = vpack.c.b16 %v242, %v241
    %v258 = vpack.c.b16 %v244, %v243
    %v259 = vpack.c.b16 %v246, %v245
    %v260 = vpack.c.b16 %v248, %v247
    %v261 = vpack.c.b16 %v250, %v249
    %v262 = vpack.c.b16 %v252, %v251
    %v263 = vpack.c.b16 %v254, %v253
    %v264 = vpack.c.b16 %v256, %v255
    %273 = vmatprep.subr.bf16.mxu0 0
    %274 = vmatpush1.bf16.msra.mxu0 %v257
    %275 = vmatprep.subr.bf16.mxu0 0
    %276 = vmatpush1.bf16.msra.mxu0 %v258
    %277 = vmatprep.subr.bf16.mxu0 0
    %278 = vmatpush1.bf16.msra.mxu0 %v259
    %279 = vmatprep.subr.bf16.mxu0 0
    %280 = vmatpush1.bf16.msra.mxu0 %v260
    %281 = vmatprep.subr.bf16.mxu0 0
    %282 = vmatpush1.bf16.msra.mxu0 %v261
    %283 = vmatprep.subr.bf16.mxu0 0
    %284 = vmatpush1.bf16.msra.mxu0 %v262
    %285 = vmatprep.subr.bf16.mxu0 0
    %286 = vmatpush1.bf16.msra.mxu0 %v263
    %287 = vmatprep.subr.bf16.mxu0 0
    %288 = vmatpush1.bf16.msra.mxu0 %v264
    %289 = vmatprep.subr.bf16.mxu0 0
    %290 = vmatpush1.bf16.msra.mxu0 0
    %291 = vmatprep.subr.bf16.mxu0 0
    %292 = vmatpush1.bf16.msra.mxu0 0
    %293 = vmatprep.subr.bf16.mxu0 0
    %294 = vmatpush1.bf16.msra.mxu0 0
    %295 = vmatprep.subr.bf16.mxu0 0
    %296 = vmatpush1.bf16.msra.mxu0 0
    %297 = vmatprep.subr.bf16.mxu0 0
    %298 = vmatpush1.bf16.msra.mxu0 0
    %299 = vmatprep.subr.bf16.mxu0 0
    %300 = vmatpush1.bf16.msra.mxu0 0
    %301 = vmatprep.subr.bf16.mxu0 0
    %302 = vmatpush1.bf16.msra.mxu0 0
    %303 = vmatprep.subr.bf16.mxu0 0
    %304 = vmatpush1.bf16.msra.mxu0 0
    %305 = vmatprep.mubr.bf16.mxu0 0
    %306 = vmatmul.mubr.bf16.gmra.mrb[0].mxu0 %v201
    %v307 = vpop.f32.mrb[0].mxu0
    %v308 = vadd.f32 %v223, %v307
    %v309 = vpop.f32.mrb[0].mxu0
    %v310 = vpop.f32.mrb[0].mxu0
    %v311 = vpop.f32.mrb[0].mxu0
    %312 = vdwg.mxu0
    %v313 = vmax.f32 %v308, 0.0
    %v314 = vpack.c.bf16 %v313, %v313
    %v315 = vld [vmem:[#allocation6] sm:$0xf]
    %v316 = vld [vmem:[#allocation6 + $0x4] sm:$0xf]
    %v317 = vld [vmem:[#allocation6 + $0x8] sm:$0xf]
    %v318 = vld [vmem:[#allocation6 + $0xc] sm:$0xf]
    %v319 = vld [vmem:[#allocation6 + $0x10] sm:$0xf]
    %v320 = vld [vmem:[#allocation6 + $0x14] sm:$0xf]
    %v321 = vld [vmem:[#allocation6 + $0x18] sm:$0xf]
    %v322 = vld [vmem:[#allocation6 + $0x1c] sm:$0xf]
    %v323 = vld [vmem:[#allocation6 + $0x20] sm:$0xf]
    %v324 = vld [vmem:[#allocation6 + $0x24] sm:$0xf]
    %v325 = vld [vmem:[#allocation6 + $0x28] sm:$0xf]
    %v326 = vld [vmem:[#allocation6 + $0x2c] sm:$0xf]
    %v327 = vld [vmem:[#allocation6 + $0x30] sm:$0xf]
    %v328 = vld [vmem:[#allocation6 + $0x34] sm:$0xf]
    %v329 = vld [vmem:[#allocation6 + $0x38] sm:$0xf]
    %v330 = vld [vmem:[#allocation6 + $0x3c] sm:$0xf]
    %v331 = vld [vmem:[%s6] sm:$0x1]
    %v333 = vlaneseq
    %v334 = vshrl.u32 %v333, 7
    %v335 = vsub.s32 0, %v334
    %v336 = vrot.slane %v331, %v335
    %v354 = vunpack.c.l.b16 %v315
    %v355 = vunpack.c.l.b16 %v316
    %v356 = vunpack.c.l.b16 %v317
    %v357 = vunpack.c.l.b16 %v318
    %v358 = vunpack.c.l.b16 %v319
    %v359 = vunpack.c.l.b16 %v320
    %v360 = vunpack.c.l.b16 %v321
    %v361 = vunpack.c.l.b16 %v322
    %v362 = vunpack.c.l.b16 %v323
    %v363 = vunpack.c.l.b16 %v324
    %v364 = vunpack.c.l.b16 %v325
    %v365 = vunpack.c.l.b16 %v326
    %v366 = vunpack.c.l.b16 %v327
    %v367 = vunpack.c.l.b16 %v328
    %v368 = vunpack.c.l.b16 %v329
    %v369 = vunpack.c.l.b16 %v330
    %v370 = vpack.c.b16 %v355, %v354
    %v371 = vpack.c.b16 %v357, %v356
    %v372 = vpack.c.b16 %v359, %v358
    %v373 = vpack.c.b16 %v361, %v360
    %v374 = vpack.c.b16 %v363, %v362
    %v375 = vpack.c.b16 %v365, %v364
    %v376 = vpack.c.b16 %v367, %v366
    %v377 = vpack.c.b16 %v369, %v368
    %386 = vmatprep.subr.bf16.mxu0 0
    %387 = vmatpush1.bf16.msra.mxu0 %v370
    %388 = vmatprep.subr.bf16.mxu0 0
    %389 = vmatpush1.bf16.msra.mxu0 %v371
    %390 = vmatprep.subr.bf16.mxu0 0
    %391 = vmatpush1.bf16.msra.mxu0 %v372
    %392 = vmatprep.subr.bf16.mxu0 0
    %393 = vmatpush1.bf16.msra.mxu0 %v373
    %394 = vmatprep.subr.bf16.mxu0 0
    %395 = vmatpush1.bf16.msra.mxu0 %v374
    %396 = vmatprep.subr.bf16.mxu0 0
    %397 = vmatpush1.bf16.msra.mxu0 %v375
    %398 = vmatprep.subr.bf16.mxu0 0
    %399 = vmatpush1.bf16.msra.mxu0 %v376
    %400 = vmatprep.subr.bf16.mxu0 0
    %401 = vmatpush1.bf16.msra.mxu0 %v377
    %402 = vmatprep.subr.bf16.mxu0 0
    %403 = vmatpush1.bf16.msra.mxu0 0
    %404 = vmatprep.subr.bf16.mxu0 0
    %405 = vmatpush1.bf16.msra.mxu0 0
    %406 = vmatprep.subr.bf16.mxu0 0
    %407 = vmatpush1.bf16.msra.mxu0 0
    %408 = vmatprep.subr.bf16.mxu0 0
    %409 = vmatpush1.bf16.msra.mxu0 0
    %410 = vmatprep.subr.bf16.mxu0 0
    %411 = vmatpush1.bf16.msra.mxu0 0
    %412 = vmatprep.subr.bf16.mxu0 0
    %413 = vmatpush1.bf16.msra.mxu0 0
    %414 = vmatprep.subr.bf16.mxu0 0
    %415 = vmatpush1.bf16.msra.mxu0 0
    %416 = vmatprep.subr.bf16.mxu0 0
    %417 = vmatpush1.bf16.msra.mxu0 0
    %418 = vmatprep.mubr.bf16.mxu0 0
    %419 = vmatmul.mubr.bf16.gmra.mrb[0].mxu0 %v314
    %v420 = vpop.f32.mrb[0].mxu0
    %v421 = vadd.f32 %v336, %v420
    %v422 = vpop.f32.mrb[0].mxu0
    %v423 = vpop.f32.mrb[0].mxu0
    %v424 = vpop.f32.mrb[0].mxu0
    %425 = vdwg.mxu0
    %v426 = vmax.f32 %v421, 0.0
    %v427 = vpack.c.bf16 %v426, %v426
    %v428 = vld [vmem:[#allocation7] sm:$0xf]
    %v429 = vld [vmem:[#allocation7 + $0x4] sm:$0xf]
    %v430 = vld [vmem:[#allocation7 + $0x8] sm:$0xf]
    %v431 = vld [vmem:[#allocation7 + $0xc] sm:$0xf]
    %v432 = vld [vmem:[#allocation7 + $0x10] sm:$0xf]
    %v433 = vld [vmem:[#allocation7 + $0x14] sm:$0xf]
    %v434 = vld [vmem:[#allocation7 + $0x18] sm:$0xf]
    %v435 = vld [vmem:[#allocation7 + $0x1c] sm:$0xf]
    %v436 = vld [vmem:[#allocation7 + $0x20] sm:$0xf]
    %v437 = vld [vmem:[#allocation7 + $0x24] sm:$0xf]
    %v438 = vld [vmem:[#allocation7 + $0x28] sm:$0xf]
    %v439 = vld [vmem:[#allocation7 + $0x2c] sm:$0xf]
    %v440 = vld [vmem:[#allocation7 + $0x30] sm:$0xf]
    %v441 = vld [vmem:[#allocation7 + $0x34] sm:$0xf]
    %v442 = vld [vmem:[#allocation7 + $0x38] sm:$0xf]
    %v443 = vld [vmem:[#allocation7 + $0x3c] sm:$0xf]
    %v444 = vld [vmem:[%s8] sm:$0x1]
    %v446 = vlaneseq
    %v447 = vshrl.u32 %v446, 7
    %v448 = vsub.s32 0, %v447
    %v449 = vrot.slane %v444, %v448
    %v467 = vunpack.c.l.b16 %v428
    %v468 = vunpack.c.l.b16 %v429
    %v469 = vunpack.c.l.b16 %v430
    %v470 = vunpack.c.l.b16 %v431
    %v471 = vunpack.c.l.b16 %v432
    %v472 = vunpack.c.l.b16 %v433
    %v473 = vunpack.c.l.b16 %v434
    %v474 = vunpack.c.l.b16 %v435
    %v475 = vunpack.c.l.b16 %v436
    %v476 = vunpack.c.l.b16 %v437
    %v477 = vunpack.c.l.b16 %v438
    %v478 = vunpack.c.l.b16 %v439
    %v479 = vunpack.c.l.b16 %v440
    %v480 = vunpack.c.l.b16 %v441
    %v481 = vunpack.c.l.b16 %v442
    %v482 = vunpack.c.l.b16 %v443
    %v483 = vpack.c.b16 %v468, %v467
    %v484 = vpack.c.b16 %v470, %v469
    %v485 = vpack.c.b16 %v472, %v471
    %v486 = vpack.c.b16 %v474, %v473
    %v487 = vpack.c.b16 %v476, %v475
    %v488 = vpack.c.b16 %v478, %v477
    %v489 = vpack.c.b16 %v480, %v479
    %v490 = vpack.c.b16 %v482, %v481
    %499 = vmatprep.subr.bf16.mxu0 0
    %500 = vmatpush1.bf16.msra.mxu0 %v483
    %501 = vmatprep.subr.bf16.mxu0 0
    %502 = vmatpush1.bf16.msra.mxu0 %v484
    %503 = vmatprep.subr.bf16.mxu0 0
    %504 = vmatpush1.bf16.msra.mxu0 %v485
    %505 = vmatprep.subr.bf16.mxu0 0
    %506 = vmatpush1.bf16.msra.mxu0 %v486
    %507 = vmatprep.subr.bf16.mxu0 0
    %508 = vmatpush1.bf16.msra.mxu0 %v487
    %509 = vmatprep.subr.bf16.mxu0 0
    %510 = vmatpush1.bf16.msra.mxu0 %v488
    %511 = vmatprep.subr.bf16.mxu0 0
    %512 = vmatpush1.bf16.msra.mxu0 %v489
    %513 = vmatprep.subr.bf16.mxu0 0
    %514 = vmatpush1.bf16.msra.mxu0 %v490
    %515 = vmatprep.subr.bf16.mxu0 0
    %516 = vmatpush1.bf16.msra.mxu0 0
    %517 = vmatprep.subr.bf16.mxu0 0
    %518 = vmatpush1.bf16.msra.mxu0 0
    %519 = vmatprep.subr.bf16.mxu0 0
    %520 = vmatpush1.bf16.msra.mxu0 0
    %521 = vmatprep.subr.bf16.mxu0 0
    %522 = vmatpush1.bf16.msra.mxu0 0
    %523 = vmatprep.subr.bf16.mxu0 0
    %524 = vmatpush1.bf16.msra.mxu0 0
    %525 = vmatprep.subr.bf16.mxu0 0
    %526 = vmatpush1.bf16.msra.mxu0 0
    %527 = vmatprep.subr.bf16.mxu0 0
    %528 = vmatpush1.bf16.msra.mxu0 0
    %529 = vmatprep.subr.bf16.mxu0 0
    %530 = vmatpush1.bf16.msra.mxu0 0
    %531 = vmatprep.mubr.bf16.mxu0 0
    %532 = vmatmul.mubr.bf16.gmra.mrb[0].mxu0 %v427
    %v533 = vpop.f32.mrb[0].mxu0
    %v534 = vadd.f32 %v449, %v533
    %v535 = vpop.f32.mrb[0].mxu0
    %v536 = vpop.f32.mrb[0].mxu0
    %v537 = vpop.f32.mrb[0].mxu0
    %538 = vdwg.mxu0
    %539 = vst [vmem:[%s9] sm:$0xff] %v534
    // Predicated region
    $region54: #{mlp_forward.1} parent=1 // pred_check
      _
    $region55: #{mlp_forward.1} parent=1 // pred_check_branch
      %541 = sbr.rel (0) target = $region57
    $region56: #{mlp_forward.1} parent=1 // pred_region
      _
    $region57: #{mlp_forward.1} parent=1 // pred_fallthru
      _
    // Predicated region
    $region58: #{mlp_forward.1} parent=1 // pred_check
      _
    $region59: #{mlp_forward.1} parent=1 // pred_check_branch
      %543 = sbr.rel (0) target = $region61
    $region60: #{mlp_forward.1} parent=1 // pred_region
      _
    $region61: #{mlp_forward.1} parent=1 // pred_fallthru
      _
    %544 = vsyncpa [#allocation3], 1
    %545 = vsyncpa [#allocation5], 1
    %546 = vsyncpa [#allocation8], 1

</llo_original>
